<compile_context>
chip_gen: v7x
topology: tpu7x:2x2x1
jax: 0.10.0
libtpu: 0.0.40
codegen_flags: <defaults>
</compile_context>

<pallas_src>
import functools

import jax
import jax.numpy as jnp
from jax import lax
from jax.experimental import pallas as pl
from jax.experimental.pallas import tpu as pltpu


def _round_up(x: int, m: int) -> int:
    return ((x + m - 1) // m) * m


def _bilinear_weight_matrix(out_size: int, in_size: int) -> jnp.ndarray:
    """[out_size, in_size] bilinear interpolation matrix (align_corners=False), f32."""
    scale = in_size / out_size
    dst = jnp.arange(out_size, dtype=jnp.float32)
    src = jnp.clip((dst + 0.5) * scale - 0.5, 0.0, float(in_size - 1))
    lo = jnp.floor(src).astype(jnp.int32)
    hi = jnp.minimum(lo + 1, in_size - 1)
    frac = src - lo.astype(jnp.float32)
    rows = jnp.arange(out_size)
    w = jnp.zeros((out_size, in_size), dtype=jnp.float32)
    w = w.at[rows, lo].add(1.0 - frac)
    w = w.at[rows, hi].add(frac)
    return w


def _physical_vmem_bytes() -> int:
    """Best-effort physical VMEM per TensorCore; conservative fallback (v7x)."""
    try:
        info = pltpu.get_tpu_info()
        for attr in ("vmem_capacity_bytes", "vmem_size_bytes", "vmem_bytes"):
            val = getattr(info, attr, None)
            if val:
                return int(val)
    except Exception:
        pass
    return 64 * 1024 * 1024


def _resize_kernel(img_ref, wwT_ref, wh_ref, out_ref, hacc_ref, acc_ref, *,
                   img_h: int, img_w: int):
    # img_ref : (1, th, tk)        x.dtype  (one channel, one H/W tile; edge tiles
    #                              may contain garbage past img_h/img_w)
    # wwT_ref : (tk, N_pad)        bf16     (zero-padded tails)
    # wh_ref  : (H_out, th)        bf16     (zero-padded tails)
    # out_ref : (1, H_out, N_pad)  x.dtype
    # hacc_ref: (th, N_pad)        f32      per-H-stripe horizontal accumulator
    # acc_ref : (H_out, N_pad)     f32      output accumulator
    h = pl.program_id(1)
    k = pl.program_id(2)
    n_h = pl.num_programs(1)
    n_k = pl.num_programs(2)
    _, th, tk = img_ref.shape

    @pl.when(jnp.logical_and(h == 0, k == 0))
    def _init_acc():
        acc_ref[...] = jnp.zeros_like(acc_ref)

    @pl.when(k == 0)
    def _init_hacc():
        hacc_ref[...] = jnp.zeros_like(hacc_ref)

    img = img_ref[0]  # (th, tk), input dtype (typically f32)
    # Zero out-of-bounds tails of partial edge tiles: OOB DMA contents are
    # unspecified and 0 * inf = NaN, so zero-padded weights alone do not protect.
    # Static python branches -> no cost when the dims tile exactly.
    if img_h % th != 0:
        rows = lax.broadcasted_iota(jnp.int32, (th, tk), 0) + h * th
        img = jnp.where(rows < img_h, img, 0.0)
    if img_w % tk != 0:
        cols = lax.broadcasted_iota(jnp.int32, (th, tk), 1) + k * tk
        img = jnp.where(cols < img_w, img, 0.0)

    # Horizontal resize of this tile, accumulated over W_in tiles (bf16 MXU inputs,
    # f32 accumulation).  The cast happens here, in-kernel (single HBM pass).
    hacc_ref[...] += jnp.dot(img.astype(jnp.bfloat16), wwT_ref[...],
                             preferred_element_type=jnp.float32)

    # When the H stripe's horizontal pass is complete, fold it into the output rows
    # (vertical resize) -- once per stripe, not once per (h, k) tile.
    @pl.when(k == n_k - 1)
    def _vertical():
        acc_ref[...] += jnp.dot(wh_ref[...], hacc_ref[...].astype(jnp.bfloat16),
                                preferred_element_type=jnp.float32)

    @pl.when(jnp.logical_and(h == n_h - 1, k == n_k - 1))
    def _finalize():
        out_ref[0] = acc_ref[...].astype(out_ref.dtype)


def resize_to(x: jnp.ndarray, dim: int = 256, *, tile_h: int = 1024,
              tile_w: int = 1024) -> jnp.ndarray:
    """Aspect-preserving bilinear resize so that max(W, H) == dim.  x: float CHW."""
    C, H, W = x.shape
    width, height = W, H  # PIL convention: img.size == (width, height)
    if width > height:
        new_width, new_height = dim, int(dim * (height / width))
    elif width < height:
        new_width, new_height = int(dim * (width / height)), dim
    else:
        new_width, new_height = dim, dim
    H_out, W_out = new_height, new_width

    # ---- tiling ---------------------------------------------------------------
    # Full dims are used directly when they fit a tile (always legal block dims);
    # otherwise tiles must be multiples of 128 (wh's last dim / lane constraints).
    th = H if H <= tile_h else tile_h
    tk = W if W <= tile_w else tile_w
    if H > tile_h:
        assert tile_h % 128 == 0, "tile_h must be a multiple of 128 when H is tiled"
    if W > tile_w:
        assert tile_w % 128 == 0, "tile_w must be a multiple of 128 when W is tiled"
    num_h = pl.cdiv(H, th)
    num_k = pl.cdiv(W, tk)
    H_in_pad = num_h * th          # weights are zero-padded; the image is NOT padded
    K_pad = num_k * tk
    N_pad = _round_up(max(W_out, 1), 128)   # lane-dense output stores; sliced after

    # ---- interpolation weights (tiny; built f32, zero-padded, fed to MXU as bf16)
    wh = _bilinear_weight_matrix(H_out, H)                                # (H_out, H)
    wh = jnp.pad(wh, ((0, 0), (0, H_in_pad - H))).astype(jnp.bfloat16)
    wwT = _bilinear_weight_matrix(W_out, W).T                             # (W, W_out)
    wwT = jnp.pad(wwT, ((0, K_pad - W), (0, N_pad - W_out))).astype(jnp.bfloat16)

    # ---- VMEM budget: actual tile footprint + headroom, capped below physical ---
    itemsize = jnp.dtype(x.dtype).itemsize
    tile_bytes = (2 * th * tk * itemsize            # image tile (double-buffered, f32)
                  + 2 * tk * N_pad * 2              # WwT tile (bf16)
                  + 2 * H_out * th * 2              # Wh tile (bf16)
                  + th * N_pad * 4                  # horizontal accumulator
                  + H_out * N_pad * 4               # output accumulator
                  + 2 * H_out * N_pad * itemsize)   # output tile
    phys = _physical_vmem_bytes()
    want = max(32 * 1024 * 1024, tile_bytes + 16 * 1024 * 1024)
    vmem_limit = min(want, max(phys - 8 * 1024 * 1024, 32 * 1024 * 1024))

    kernel = functools.partial(_resize_kernel, img_h=H, img_w=W)

    out_padded = pl.pallas_call(
        kernel,
        out_shape=jax.ShapeDtypeStruct((C, H_out, N_pad), x.dtype),
        grid_spec=pltpu.PrefetchScalarGridSpec(
            num_scalar_prefetch=0,
            grid=(C, num_h, num_k),            # channels parallel, H/W reductions last
            in_specs=[
                pl.BlockSpec((1, th, tk), lambda c, h, k: (c, h, k)),    # image tile
                pl.BlockSpec((tk, N_pad), lambda c, h, k: (k, 0)),       # Ww^T tile
                pl.BlockSpec((H_out, th), lambda c, h, k: (0, h)),       # Wh stripe
            ],
            out_specs=pl.BlockSpec((1, H_out, N_pad), lambda c, h, k: (c, 0, 0)),
            scratch_shapes=[
                pltpu.VMEM((th, N_pad), jnp.float32),     # horizontal accumulator
                pltpu.VMEM((H_out, N_pad), jnp.float32),  # output accumulator
            ],
        ),
        compiler_params=pltpu.CompilerParams(
            dimension_semantics=("parallel", "arbitrary", "arbitrary"),
            vmem_limit_bytes=int(vmem_limit),
        ),
    )(x, wwT, wh)

    return out_padded[:, :, :W_out]


def _reference(x, H_out, W_out):
    """Pure-JAX f32 reference of the same (non-antialiased) bilinear math."""
    _, H, W = x.shape
    wh = _bilinear_weight_matrix(H_out, H)
    ww = _bilinear_weight_matrix(W_out, W)
    return jnp.einsum("oh,chw,pw->cop", wh, x.astype(jnp.float32), ww)


if __name__ == "__main__":
    key = jax.random.PRNGKey(0)
    k1, k2, k3 = jax.random.split(key, 3)

    # Landscape case (width > height branch): (3, 12, 16), dim=8 -> (3, 6, 8).
    x1 = jax.random.uniform(k1, (3, 12, 16), dtype=jnp.float32)
    y1 = jax.block_until_ready(resize_to(x1, dim=8))
    assert y1.shape == (3, 6, 8), y1.shape
    assert y1.dtype == x1.dtype
    r1 = _reference(x1, 6, 8)
    assert float(jnp.max(jnp.abs(y1 - r1))) < 3e-2, float(jnp.max(jnp.abs(y1 - r1)))

    # Portrait case (width < height branch): (3, 16, 12), dim=8 -> (3, 8, 6).
    x2 = jax.random.uniform(k2, (3, 16, 12), dtype=jnp.float32)
    y2 = jax.block_until_ready(resize_to(x2, dim=8))
    assert y2.shape == (3, 8, 6), y2.shape
    r2 = _reference(x2, 8, 6)
    assert float(jnp.max(jnp.abs(y2 - r2))) < 3e-2, float(jnp.max(jnp.abs(y2 - r2)))

    # Multi-tile path: exercises H/W tiling, in-kernel tail masking and the two-level
    # accumulator with small forced tile sizes.  (3, 200, 300), dim=64 -> (3, 42, 64).
    x3 = jax.random.uniform(k3, (3, 200, 300), dtype=jnp.float32)
    y3 = jax.block_until_ready(resize_to(x3, dim=64, tile_h=128, tile_w=128))
    assert y3.shape == (3, 42, 64), y3.shape
    r3 = _reference(x3, 42, 64)
    assert float(jnp.max(jnp.abs(y3 - r3))) < 3e-2, float(jnp.max(jnp.abs(y3 - r3)))

    print("KERNEL_OK")
</pallas_src>

<mosaic_0001>
module attributes {stable_mosaic.version = 11 : i64} {
  func.func @_resize_kernel(%arg0: i32, %arg1: i32, %arg2: i32, %arg3: memref<1x12x16xf32, #tpu.memory_space<vmem>>, %arg4: memref<16x128xbf16, #tpu.memory_space<vmem>>, %arg5: memref<6x12xbf16, #tpu.memory_space<vmem>>, %arg6: memref<1x6x128xf32, #tpu.memory_space<vmem>>, %arg7: memref<12x128xf32, #tpu.memory_space<vmem>>, %arg8: memref<6x128xf32, #tpu.memory_space<vmem>>) attributes {dimension_semantics = [#tpu.dimension_semantics<parallel>, #tpu.dimension_semantics<arbitrary>, #tpu.dimension_semantics<arbitrary>], iteration_bounds = array<i64: 3, 1, 1>, scalar_prefetch = 0 : i64, scratch_operands = 2 : i64, tpu.core_type = #tpu.core_type<tc>, window_params = [{transform_indices = @transform_0, window_bounds = array<i64: 1, 12, 16>}, {transform_indices = @transform_1, window_bounds = array<i64: 16, 128>}, {transform_indices = @transform_2, window_bounds = array<i64: 6, 12>}, {transform_indices = @transform_3, window_bounds = array<i64: 1, 6, 128>}]} {
    %c0_i32 = arith.constant 0 : i32
    %0 = arith.cmpi eq, %arg1, %c0_i32 : i32
    %c0_i32_0 = arith.constant 0 : i32
    %1 = arith.cmpi eq, %arg2, %c0_i32_0 : i32
    %2 = arith.andi %0, %1 : i1
    %3 = arith.extui %2 : i1 to i32
    %c0_i32_1 = arith.constant 0 : i32
    %4 = arith.cmpi ne, %3, %c0_i32_1 : i32
    scf.if %4 {
      %cst_17 = arith.constant 0.000000e+00 : f32
      %24 = vector.broadcast %cst_17 : f32 to vector<6x128xf32>
      %c0_18 = arith.constant 0 : index
      %c0_19 = arith.constant 0 : index
      %25 = vector.load %arg8[%c0_18, %c0_19] : memref<6x128xf32, #tpu.memory_space<vmem>>, vector<6x128xf32>
      tpu.vector_store %arg8[%c0_18, %c0_19], %24 {strides = array<i32>} : memref<6x128xf32, #tpu.memory_space<vmem>>, vector<6x128xf32>,
    } else {
    }
    %c0_i32_2 = arith.constant 0 : i32
    %5 = arith.cmpi eq, %arg2, %c0_i32_2 : i32
    %6 = arith.extui %5 : i1 to i32
    %c0_i32_3 = arith.constant 0 : i32
    %7 = arith.cmpi ne, %6, %c0_i32_3 : i32
    scf.if %7 {
      %cst_17 = arith.constant 0.000000e+00 : f32
      %24 = vector.broadcast %cst_17 : f32 to vector<12x128xf32>
      %c0_18 = arith.constant 0 : index
      %c0_19 = arith.constant 0 : index
      %25 = vector.load %arg7[%c0_18, %c0_19] : memref<12x128xf32, #tpu.memory_space<vmem>>, vector<12x128xf32>
      tpu.vector_store %arg7[%c0_18, %c0_19], %24 {strides = array<i32>} : memref<12x128xf32, #tpu.memory_space<vmem>>, vector<12x128xf32>,
    } else {
    }
    %c0 = arith.constant 0 : index
    %c0_4 = arith.constant 0 : index
    %c0_5 = arith.constant 0 : index
    %8 = vector.load %arg3[%c0, %c0_4, %c0_5] : memref<1x12x16xf32, #tpu.memory_space<vmem>>, vector<1x12x16xf32>
    %9 = vector.shape_cast %8 : vector<1x12x16xf32> to vector<12x16xf32>
    %c0_6 = arith.constant 0 : index
    %c0_7 = arith.constant 0 : index
    %10 = vector.load %arg7[%c0_6, %c0_7] : memref<12x128xf32, #tpu.memory_space<vmem>>, vector<12x128xf32>
    %11 = arith.truncf %9 : vector<12x16xf32> to vector<12x16xbf16>
    %c0_8 = arith.constant 0 : index
    %c0_9 = arith.constant 0 : index
    %12 = vector.load %arg4[%c0_8, %c0_9] : memref<16x128xbf16, #tpu.memory_space<vmem>>, vector<16x128xbf16>
    %cst = arith.constant dense<0.000000e+00> : vector<12x128xf32>
    %13 = tpu.matmul %11, %12, %cst {dimension_numbers = #tpu.dot_dimension_numbers<[1], [0], [0], [1], [0, 0, 1, 1], [], []>} : vector<12x16xbf16>, vector<16x128xbf16>, vector<12x128xf32> -> vector<12x128xf32>
    %14 = arith.addf %10, %13 : vector<12x128xf32>
    %c0_10 = arith.constant 0 : index
    %c0_11 = arith.constant 0 : index
    %15 = vector.load %arg7[%c0_10, %c0_11] : memref<12x128xf32, #tpu.memory_space<vmem>>, vector<12x128xf32>
    tpu.vector_store %arg7[%c0_10, %c0_11], %14 {strides = array<i32>} : memref<12x128xf32, #tpu.memory_space<vmem>>, vector<12x128xf32>,
    %c0_i32_12 = arith.constant 0 : i32
    %16 = arith.cmpi eq, %arg2, %c0_i32_12 : i32
    %17 = arith.extui %16 : i1 to i32
    %c0_i32_13 = arith.constant 0 : i32
    %18 = arith.cmpi ne, %17, %c0_i32_13 : i32
    scf.if %18 {
      %c0_17 = arith.constant 0 : index
      %c0_18 = arith.constant 0 : index
      %24 = vector.load %arg8[%c0_17, %c0_18] : memref<6x128xf32, #tpu.memory_space<vmem>>, vector<6x128xf32>
      %c0_19 = arith.constant 0 : index
      %c0_20 = arith.constant 0 : index
      %25 = vector.load %arg5[%c0_19, %c0_20] : memref<6x12xbf16, #tpu.memory_space<vmem>>, vector<6x12xbf16>
      %c0_21 = arith.constant 0 : index
      %c0_22 = arith.constant 0 : index
      %26 = vector.load %arg7[%c0_21, %c0_22] : memref<12x128xf32, #tpu.memory_space<vmem>>, vector<12x128xf32>
      %27 = arith.truncf %26 : vector<12x128xf32> to vector<12x128xbf16>
      %cst_23 = arith.constant dense<0.000000e+00> : vector<6x128xf32>
      %28 = tpu.matmul %25, %27, %cst_23 {dimension_numbers = #tpu.dot_dimension_numbers<[1], [0], [0], [1], [0, 0, 1, 1], [], []>} : vector<6x12xbf16>, vector<12x128xbf16>, vector<6x128xf32> -> vector<6x128xf32>
      %29 = arith.addf %24, %28 : vector<6x128xf32>
      %c0_24 = arith.constant 0 : index
      %c0_25 = arith.constant 0 : index
      %30 = vector.load %arg8[%c0_24, %c0_25] : memref<6x128xf32, #tpu.memory_space<vmem>>, vector<6x128xf32>
      tpu.vector_store %arg8[%c0_24, %c0_25], %29 {strides = array<i32>} : memref<6x128xf32, #tpu.memory_space<vmem>>, vector<6x128xf32>,
    } else {
    }
    %c0_i32_14 = arith.constant 0 : i32
    %19 = arith.cmpi eq, %arg1, %c0_i32_14 : i32
    %c0_i32_15 = arith.constant 0 : i32
    %20 = arith.cmpi eq, %arg2, %c0_i32_15 : i32
    %21 = arith.andi %19, %20 : i1
    %22 = arith.extui %21 : i1 to i32
    %c0_i32_16 = arith.constant 0 : i32
    %23 = arith.cmpi ne, %22, %c0_i32_16 : i32
    scf.if %23 {
      %c0_17 = arith.constant 0 : index
      %c0_18 = arith.constant 0 : index
      %24 = vector.load %arg8[%c0_17, %c0_18] : memref<6x128xf32, #tpu.memory_space<vmem>>, vector<6x128xf32>
      %c0_19 = arith.constant 0 : index
      %c0_20 = arith.constant 0 : index
      %c0_21 = arith.constant 0 : index
      %25 = vector.load %arg6[%c0_19, %c0_20, %c0_21] : memref<1x6x128xf32, #tpu.memory_space<vmem>>, vector<1x6x128xf32>
      %26 = vector.shape_cast %25 : vector<1x6x128xf32> to vector<6x128xf32>
      %27 = vector.shape_cast %24 : vector<6x128xf32> to vector<1x6x128xf32>
      tpu.vector_store %arg6[%c0_19, %c0_20, %c0_21], %27 {strides = array<i32>} : memref<1x6x128xf32, #tpu.memory_space<vmem>>, vector<1x6x128xf32>,
    } else {
    }
    return
  }
  func.func @transform_0(%arg0: i32, %arg1: i32, %arg2: i32) -> (i32, i32, i32) {
    %c0_i32 = arith.constant 0 : i32
    return %arg0, %arg1, %arg2 : i32, i32, i32
  }
  func.func @transform_1(%arg0: i32, %arg1: i32, %arg2: i32) -> (i32, i32) {
    %c0_i32 = arith.constant 0 : i32
    %c0_i32_0 = arith.constant 0 : i32
    return %arg2, %c0_i32 : i32, i32
  }
  func.func @transform_2(%arg0: i32, %arg1: i32, %arg2: i32) -> (i32, i32) {
    %c0_i32 = arith.constant 0 : i32
    %c0_i32_0 = arith.constant 0 : i32
    return %c0_i32, %arg1 : i32, i32
  }
  func.func @transform_3(%arg0: i32, %arg1: i32, %arg2: i32) -> (i32, i32, i32) {
    %c0_i32 = arith.constant 0 : i32
    %c0_i32_0 = arith.constant 0 : i32
    %c0_i32_1 = arith.constant 0 : i32
    return %arg0, %c0_i32, %c0_i32_0 : i32, i32, i32
  }
}

</mosaic_0001>

<llo_original>
// kernel: tpu_custom_call.1
$region0: #{tpu_custom_call.1}
  #allocation0 [shape = 'u32[]', space=smem, size = 0x4, offset = 0x4, fixed_abs, tag = 'smem constant byte address 0x4 - core index']
  #allocation1 [shape = 'u32[144,128]{1,0:T(1,128)}', space=vmem, size = 0x12000, scoped, tag = 'internal scratch']
  #allocation2 [shape = 'f32[12,128]{1,0:T(8,128)}', space=vmem, size = 0x2000, scoped, tag = 'scratch operand']
  #allocation3 [shape = 'f32[6,128]{1,0:T(8,128)}', space=vmem, size = 0x1000, scoped, tag = 'scratch operand']
  %s0 = inlined_call_operand.hbm [shape: f32[3,12,16], index: 0, kind: input, shape index: {}]
  %s1 = inlined_call_operand.hbm [shape: bf16[16,128], index: 1, kind: input, shape index: {}]
  %s2 = inlined_call_operand.vmem [shape: bf16[6,12], index: 2, kind: input, shape index: {}]
  %s3 = inlined_call_operand.hbm [shape: f32[3,6,128], index: 3, kind: output, shape index: {}]
  %s4 = sld [smem:[#allocation0]]
  $region69: #{tpu_custom_call.1} parent=0
    _
  %s6 = ssub.s32 1, %s4
  %s7 = scalar_select 0, %s6, %s4
  $region1: #{tpu_custom_call.1} parent=0
    #allocation4 [shape = 'u8[16384]{0}', space=vmem, size = 0x4000, scoped, tag = 'input window, operand 0']
    #allocation5 [shape = 's32[2]{0}', space=sflag, size = 0x8, scoped, tag = 'scoped memory for tpu_custom_call.1']
    #allocation6 [shape = 's32[2]{0}', space=sflag, size = 0x8, scoped, tag = 'scoped memory for tpu_custom_call.1']
    #allocation7 [shape = 'u8[4096]{0}', space=vmem, size = 0x1000, scoped, tag = 'input window, operand 1, single buffered']
    #allocation8 [shape = 's32[1]{0}', space=sflag, size = 0x4, scoped, tag = 'scoped memory for tpu_custom_call.1']
    #allocation9 [shape = 'u8[8192]{0}', space=vmem, size = 0x2000, scoped, tag = 'output window, operand 0']
    %8 = vsyncpa [#allocation5], 0
    %s9 = scalar_lea.sflag [#allocation5], 1
    %10 = vsyncpa %s9, 0
    %11 = vsyncpa [#allocation8], 0
    %12 = vsyncpa [#allocation6], 0
    %s13 = scalar_lea.sflag [#allocation6], 1
    %14 = vsyncpa %s13, 0
    loop: start=0, step=1, limit=5
    $region2: #{tpu_custom_call.1} parent=1 // loop_pre_header
      _
    $region3: #{tpu_custom_call.1} parent=1 // loop_header
      %s16 = sphi 0, %s20
      %p17 = scmp.ge.s32.totalorder %s16, 5
      %s23 = sphi 0, %s42
      %s24 = sphi 0, %s38
      %s25 = sphi 0, %s34
      %s26 = sphi 0, %s23
      %s27 = sphi 0, %s24
      %s28 = sphi 0, %s25
      %s29 = sphi 0, %s26
      %s30 = sphi 0, %s27
      %s31 = sphi 0, %s28
      %s49 = sphi 0, %s51
      %s52 = sphi 0, %s49
      %s53 = sphi 0, %s52
      %s69 = sphi 0, %s53
      %s75 = sphi 0, %s77
      %s78 = sphi 0, %s75
      %s79 = sphi 0, %s78
      %s95 = sphi 0, %s79
      %s101 = sphi 0, %s103
      %s104 = sphi 0, %s101
      %s105 = sphi 0, %s104
      %s121 = sphi 0, %s105
      %s127 = sphi 0, %s129
      %s130 = sphi 0, %s127
      %s131 = sphi 0, %s130
      %s147 = sphi 0, %s131
    $region4: #{tpu_custom_call.1} parent=1 // loop_header_branch
      %19 = sbr.rel (%p17) target = $region8
    $region5: #{tpu_custom_call.1} parent=1 // loop_body
      %s21 = ssub.s32 %s16, 1
      %s22 = ssub.s32 %s16, 2
      %s32 = sadd.s32 1, %s25
      %p33 = scmp.ge.s32.totalorder %s32, 1
      %s34 = scalar_select %p33, 0, %s32
      %s35 = sadd.s32 1, %s24
      %s36 = scalar_select %p33, %s35, %s24
      %p37 = scmp.ge.s32.totalorder %s36, 1
      %s38 = scalar_select %p37, 0, %s36
      %s39 = sadd.s32 1, %s23
      %s40 = scalar_select %p37, %s39, %s23
      %p41 = scmp.ge.s32.totalorder %s40, 3
      %s42 = scalar_select %p41, 0, %s40
      %s43 = ssub.s32 %s23, %s42
      %s44 = ssub.s32 %s24, %s38
      %s45 = sor.u32 %s43, %s44
      %s46 = ssub.s32 %s25, %s34
      %s47 = sor.u32 %s45, %s46
      %p48 = scmp.eq.s32.totalorder %s47, 0
      %s50 = sadd.s32 %s49, 1
      %s51 = scalar_select %p48, %s49, %s50
      %p54 = pneg %p48
      %p55 = scmp.eq.s32.totalorder %s16, 2
      %p56 = por %p54, %p55
      %p57 = scmp.ne.s32.totalorder %s49, %s52
      %p58 = scmp.eq.s32.totalorder %s16, 0
      %p59 = por %p57, %p58
      %p60 = scmp.ne.s32.totalorder %s49, %s52
      %p61 = scmp.eq.s32.totalorder %s21, 2
      %p62 = por %p60, %p61
      %p63 = scmp.ne.s32.totalorder %s52, %s53
      %p64 = scmp.eq.s32.totalorder %s21, 0
      %p65 = por %p63, %p64
      %p66 = scmp.ne.s32.totalorder %s52, %s53
      %p67 = scmp.eq.s32.totalorder %s22, 2
      %p68 = por %p66, %p67
      %p70 = scmp.ne.s32.totalorder %s53, %s69
      %p71 = scmp.eq.s32.totalorder %s22, 0
      %p72 = por %p70, %p71
      %s73 = ssub.s32 %s25, %s34
      %p74 = scmp.eq.s32.totalorder %s73, 0
      %s76 = sadd.s32 %s75, 1
      %s77 = scalar_select %p74, %s75, %s76
      %p80 = pneg %p74
      %p81 = scmp.eq.s32.totalorder %s16, 2
      %p82 = por %p80, %p81
      %p83 = scmp.ne.s32.totalorder %s75, %s78
      %p84 = scmp.eq.s32.totalorder %s16, 0
      %p85 = por %p83, %p84
      %p86 = scmp.ne.s32.totalorder %s75, %s78
      %p87 = scmp.eq.s32.totalorder %s21, 2
      %p88 = por %p86, %p87
      %p89 = scmp.ne.s32.totalorder %s78, %s79
      %p90 = scmp.eq.s32.totalorder %s21, 0
      %p91 = por %p89, %p90
      %p92 = scmp.ne.s32.totalorder %s78, %s79
      %p93 = scmp.eq.s32.totalorder %s22, 2
      %p94 = por %p92, %p93
      %p96 = scmp.ne.s32.totalorder %s79, %s95
      %p97 = scmp.eq.s32.totalorder %s22, 0
      %p98 = por %p96, %p97
      %s99 = ssub.s32 %s24, %s38
      %p100 = scmp.eq.s32.totalorder %s99, 0
      %s102 = sadd.s32 %s101, 1
      %s103 = scalar_select %p100, %s101, %s102
      %p106 = pneg %p100
      %p107 = scmp.eq.s32.totalorder %s16, 2
      %p108 = por %p106, %p107
      %p109 = scmp.ne.s32.totalorder %s101, %s104
      %p110 = scmp.eq.s32.totalorder %s16, 0
      %p111 = por %p109, %p110
      %p112 = scmp.ne.s32.totalorder %s101, %s104
      %p113 = scmp.eq.s32.totalorder %s21, 2
      %p114 = por %p112, %p113
      %p115 = scmp.ne.s32.totalorder %s104, %s105
      %p116 = scmp.eq.s32.totalorder %s21, 0
      %p117 = por %p115, %p116
      %p118 = scmp.ne.s32.totalorder %s104, %s105
      %p119 = scmp.eq.s32.totalorder %s22, 2
      %p120 = por %p118, %p119
      %p122 = scmp.ne.s32.totalorder %s105, %s121
      %p123 = scmp.eq.s32.totalorder %s22, 0
      %p124 = por %p122, %p123
      %s125 = ssub.s32 %s23, %s42
      %p126 = scmp.eq.s32.totalorder %s125, 0
      %s128 = sadd.s32 %s127, 1
      %s129 = scalar_select %p126, %s127, %s128
      %p132 = pneg %p126
      %p133 = scmp.eq.s32.totalorder %s16, 2
      %p134 = por %p132, %p133
      %p135 = scmp.ne.s32.totalorder %s127, %s130
      %p136 = scmp.eq.s32.totalorder %s16, 0
      %p137 = por %p135, %p136
      %p138 = scmp.ne.s32.totalorder %s127, %s130
      %p139 = scmp.eq.s32.totalorder %s21, 2
      %p140 = por %p138, %p139
      %p141 = scmp.ne.s32.totalorder %s130, %s131
      %p142 = scmp.eq.s32.totalorder %s21, 0
      %p143 = por %p141, %p142
      %p144 = scmp.ne.s32.totalorder %s130, %s131
      %p145 = scmp.eq.s32.totalorder %s22, 2
      %p146 = por %p144, %p145
      %p148 = scmp.ne.s32.totalorder %s131, %s147
      %p149 = scmp.eq.s32.totalorder %s22, 0
      %p150 = por %p148, %p149
      %p151 = scmp.le.s32.totalorder 1, %s16
      %p152 = scmp.lt.s32.totalorder %s16, 4
      %p153 = pnand %p151, %p152
      %p154 = pneg %p153
      // Predicated region
      $region9: #{tpu_custom_call.1} parent=5 // pred_check
        _
      $region10: #{tpu_custom_call.1} parent=5 // pred_check_branch
        %156 = sbr.rel (%p153) target = $region12
      $region11: #{tpu_custom_call.1} parent=5 // pred_region
        %s157 = ssub.s32 %s16, 1
        // Predicated region
        $region13: #{tpu_custom_call.1} parent=11 // pred_check
          %p158 = pneg %p91
        $region14: #{tpu_custom_call.1} parent=11 // pred_check_branch
          %160 = sbr.rel (%p158) target = $region16
        $region15: #{tpu_custom_call.1} parent=11 // pred_region
          %s161 = smul.u32 2, %s28
          %s163 = ssub.s32 128, 128
          %164 = vsyncadd [#allocation8], %s163
          %s165 = smul.addr %s161, 64
          %s166 = scalar_lea.hbm %s1, %s165
          %s167 = sshll.u32 [#allocation7], 4
          %s168 = int_to_ptr.vmem [resolvable:$true] %s167
          %173 = dma.hbm_to_vmem [thread:$0]  %s166, 128, %s168, [#allocation8], 64, 64, 4
        $region16: #{tpu_custom_call.1} parent=11 // pred_fallthru
          _
        // Predicated region
        $region17: #{tpu_custom_call.1} parent=11 // pred_check
          %p174 = pneg %p117
        $region18: #{tpu_custom_call.1} parent=11 // pred_check_branch
          %176 = sbr.rel (%p174) target = $region20
        $region19: #{tpu_custom_call.1} parent=11 // pred_region
          %p177 = scmp.lt.s32.totalorder %s27, 0
          %s178 = scalar_select %p177, %s27, 0
          %s179 = smul.addr %s178, 4
          %s180 = scalar_lea.vmem %s2, %s179
        $region20: #{tpu_custom_call.1} parent=11 // pred_fallthru
          _
      $region12: #{tpu_custom_call.1} parent=5 // pred_fallthru
        _
      %p181 = scmp.lt.s32.totalorder %s16, 3
      // Predicated region
      $region21: #{tpu_custom_call.1} parent=5 // pred_check
        %p182 = pneg %p181
      $region22: #{tpu_custom_call.1} parent=5 // pred_check_branch
        %184 = sbr.rel (%p182) target = $region24
      $region23: #{tpu_custom_call.1} parent=5 // pred_region
        // Predicated region
        $region25: #{tpu_custom_call.1} parent=23 // pred_check
          %p185 = pneg %p59
        $region26: #{tpu_custom_call.1} parent=23 // pred_check_branch
          %187 = sbr.rel (%p185) target = $region28
        $region27: #{tpu_custom_call.1} parent=23 // pred_region
          %s188 = sand.u32 %s49, 1
          %s189 = scalar_lea.sflag [#allocation5], %s188
          %s190 = sand.u32 %s49, 1
          %s191 = smul.addr %s190, 16
          %s192 = scalar_lea.vmem [#allocation4], %s191
          %s193 = smul.u32 2, %s24
          %s195 = ssub.s32 256, 256
          %196 = vsyncadd %s189, %s195
          %s197 = sadd.s32 %s25, %s193
          %s198 = smul.addr %s23, 2
          %s199 = sadd.s32 %s197, %s198
          %s200 = smul.addr %s199, 128
          %s201 = scalar_lea.hbm %s0, %s200
          %s202 = sshll.u32 %s192, 4
          %s203 = int_to_ptr.vmem [resolvable:$true] %s202
          %208 = dma.hbm_to_vmem [thread:$0]  %s201, 256, %s203, %s189, 128, 128, 8
        $region28: #{tpu_custom_call.1} parent=23 // pred_fallthru
          _
      $region24: #{tpu_custom_call.1} parent=5 // pred_fallthru
        _
      %p209 = scmp.le.s32.totalorder 1, %s16
      %p210 = scmp.lt.s32.totalorder %s16, 4
      %p211 = pnand %p209, %p210
      %p212 = pneg %p211
      // Predicated region
      $region29: #{tpu_custom_call.1} parent=5 // pred_check
        _
      $region30: #{tpu_custom_call.1} parent=5 // pred_check_branch
        %214 = sbr.rel (%p211) target = $region32
      $region31: #{tpu_custom_call.1} parent=5 // pred_region
        %s215 = ssub.s32 %s16, 1
        %s216 = sand.u32 %s52, 1
        %s217 = scalar_lea.sflag [#allocation5], %s216
        %s218 = sand.u32 %s52, 1
        %s219 = smul.addr %s218, 16
        %s220 = scalar_lea.vmem [#allocation4], %s219
        // Predicated region
        $region33: #{tpu_custom_call.1} parent=31 // pred_check
          %p221 = pneg %p65
        $region34: #{tpu_custom_call.1} parent=31 // pred_check_branch
          %223 = sbr.rel (%p221) target = $region36
        $region35: #{tpu_custom_call.1} parent=31 // pred_region
          %224 = dma.done %s217, 256
        $region36: #{tpu_custom_call.1} parent=31 // pred_fallthru
          _
        // Predicated region
        $region37: #{tpu_custom_call.1} parent=31 // pred_check
          %p225 = pneg %p91
        $region38: #{tpu_custom_call.1} parent=31 // pred_check_branch
          %227 = sbr.rel (%p225) target = $region40
        $region39: #{tpu_custom_call.1} parent=31 // pred_region
          %228 = dma.done [#allocation8], 128
        $region40: #{tpu_custom_call.1} parent=31 // pred_fallthru
          _
        %s229 = sand.u32 %s52, 1
        %s230 = scalar_lea.sflag [#allocation5], %s229
        %s231 = sand.u32 %s52, 1
        %s232 = smul.addr %s231, 16
        %s233 = scalar_lea.vmem [#allocation4], %s232
        %p234 = pneg %p65
        %p235 = pneg %p62
        %p236 = pneg %p91
        %p237 = pneg %p88
        %p238 = scmp.lt.s32.totalorder %s27, 0
        %s239 = scalar_select %p238, %s27, 0
        %s240 = smul.addr %s239, 4
        %s241 = scalar_lea.vmem %s2, %s240
        %p242 = pneg %p117
        %p243 = pneg %p114
        %p244 = pneg %p143
        %p245 = pneg %p140
        %s246 = sand.u32 %s130, 1
        %s247 = scalar_lea.sflag [#allocation6], %s246
        %s248 = sand.u32 %s130, 1
        %s249 = smul.addr %s248, 8
        %s250 = scalar_lea.vmem [#allocation9], %s249
        %s251 = smul.u32 2, %s27
        %s252 = smul.u32 2, %s28
        %p253 = scmp.lt.s32.totalorder %s27, 0
        %s254 = scalar_select %p253, %s27, 0
        %s255 = smul.addr %s254, 4
        %s256 = scalar_lea.vmem %s2, %s255
        %p258 = scmp.eq.s32.totalorder %s27, 0
        %p259 = scmp.eq.s32.totalorder %s28, 0
        %p260 = pnand %p258, %p259
        %p261 = pneg %p260
        // Predicated region
        $region41: #{tpu_custom_call.1} parent=31 // pred_check
          _
        $region42: #{tpu_custom_call.1} parent=31 // pred_check_branch
          %263 = sbr.rel (%p260) target = $region44
        $region43: #{tpu_custom_call.1} parent=31 // pred_region
          %264 = vst [vmem:[#allocation3] sm:$0x3f] 0.0
        $region44: #{tpu_custom_call.1} parent=31 // pred_fallthru
          _
        // Predicated region
        $region45: #{tpu_custom_call.1} parent=31 // pred_check
          %p265 = pneg %p259
        $region46: #{tpu_custom_call.1} parent=31 // pred_check_branch
          %267 = sbr.rel (%p265) target = $region48
        $region47: #{tpu_custom_call.1} parent=31 // pred_region
          %268 = vst [vmem:[#allocation2] sm:$0xff] 0.0
          %269 = vst [vmem:[#allocation2 + $0x8] sm:$0xf] 0.0
        $region48: #{tpu_custom_call.1} parent=31 // pred_fallthru
          _
        %v270 = vld [vmem:[%s220] sm:$0xff]
        %v271 = vld [vmem:[%s220 + $0x8] sm:$0xf]
        %v272 = vld [vmem:[#allocation2] sm:$0xff]
        %v273 = vld [vmem:[#allocation2 + $0x8] sm:$0xf]
        %v274 = vpack.c.bf16 %v271, %v270
        %v275 = vld [vmem:[#allocation7] sm:$0xf]
        %v276 = vld [vmem:[#allocation7 + $0x4] sm:$0xf]
        %v279 = vunpack.c.l.b16 %v275
        %v280 = vunpack.c.l.b16 %v276
        %v281 = vpack.c.b16 %v280, %v279
        %vm283 = vcmask 130048
        %v285 = vsel %vm283, %v274, 0
        %287 = vmatprep.subr.bf16.mxu0 0
        %288 = vmatpush1.bf16.msra.mxu0 %v281
        %289 = vmatprep.subr.bf16.mxu0 0
        %290 = vmatpush1.bf16.msra.mxu0 0
        %291 = vmatprep.subr.bf16.mxu0 0
        %292 = vmatpush1.bf16.msra.mxu0 0
        %293 = vmatprep.subr.bf16.mxu0 0
        %294 = vmatpush1.bf16.msra.mxu0 0
        %295 = vmatprep.subr.bf16.mxu0 0
        %296 = vmatpush1.bf16.msra.mxu0 0
        %297 = vmatprep.subr.bf16.mxu0 0
        %298 = vmatpush1.bf16.msra.mxu0 0
        %299 = vmatprep.subr.bf16.mxu0 0
        %300 = vmatpush1.bf16.msra.mxu0 0
        %301 = vmatprep.subr.bf16.mxu0 0
        %302 = vmatpush1.bf16.msra.mxu0 0
        %303 = vmatprep.subr.bf16.mxu0 0
        %304 = vmatpush1.bf16.msra.mxu0 0
        %305 = vmatprep.subr.bf16.mxu0 0
        %306 = vmatpush1.bf16.msra.mxu0 0
        %307 = vmatprep.subr.bf16.mxu0 0
        %308 = vmatpush1.bf16.msra.mxu0 0
        %309 = vmatprep.subr.bf16.mxu0 0
        %310 = vmatpush1.bf16.msra.mxu0 0
        %311 = vmatprep.subr.bf16.mxu0 0
        %312 = vmatpush1.bf16.msra.mxu0 0
        %313 = vmatprep.subr.bf16.mxu0 0
        %314 = vmatpush1.bf16.msra.mxu0 0
        %315 = vmatprep.subr.bf16.mxu0 0
        %316 = vmatpush1.bf16.msra.mxu0 0
        %317 = vmatprep.subr.bf16.mxu0 0
        %318 = vmatpush1.bf16.msra.mxu0 0
        %319 = vmatprep.mubr.bf16.mxu0 0
        %320 = vmatmul.mubr.bf16.gmra.mrb[0].mxu0 %v285
        %v321 = vpop.f32.mrb[0].mxu0
        %v322 = vadd.f32 0.0, %v321
        %v323 = vpop.f32.mrb[0].mxu0
        %v324 = vpop.f32.mrb[0].mxu0
        %v325 = vadd.f32 0.0, %v324
        %v326 = vpop.f32.mrb[0].mxu0
        %327 = vdwg.mxu0
        %v328 = vadd.f32 %v272, %v322
        %v329 = vadd.f32 %v273, %v325
        %330 = vst [vmem:[#allocation2] sm:$0xff] %v328
        %331 = vst [vmem:[#allocation2 + $0x8] sm:$0xf] %v329
        // Predicated region
        $region49: #{tpu_custom_call.1} parent=31 // pred_check
          %p332 = pneg %p259
        $region50: #{tpu_custom_call.1} parent=31 // pred_check_branch
          %334 = sbr.rel (%p332) target = $region52
        $region51: #{tpu_custom_call.1} parent=31 // pred_region
          %v335 = vld [vmem:[#allocation3] sm:$0x3f]
          %v336 = vld [vmem:[%s256] sm:$0x7]
          %v337 = vld [vmem:[#allocation2] sm:$0xff]
          %v338 = vld [vmem:[#allocation2 + $0x8] sm:$0xf]
          %v339 = vpack.c.bf16 %v338, %v337
          %vm340 = vcmask 97280
          %v342 = vsel %vm340, %v336, 0
          %vm344 = vcmask 1045504
          %v346 = vsel %vm344, %v339, 0
          %348 = vmatprep.subr.bf16.mxu0 0
          %349 = vmatpush1.bf16.msra.mxu0 %v346
          %350 = vmatprep.subr.bf16.mxu0 0
          %351 = vmatpush1.bf16.msra.mxu0 0
          %352 = vmatprep.subr.bf16.mxu0 0
          %353 = vmatpush1.bf16.msra.mxu0 0
          %354 = vmatprep.subr.bf16.mxu0 0
          %355 = vmatpush1.bf16.msra.mxu0 0
          %356 = vmatprep.subr.bf16.mxu0 0
          %357 = vmatpush1.bf16.msra.mxu0 0
          %358 = vmatprep.subr.bf16.mxu0 0
          %359 = vmatpush1.bf16.msra.mxu0 0
          %360 = vmatprep.subr.bf16.mxu0 0
          %361 = vmatpush1.bf16.msra.mxu0 0
          %362 = vmatprep.subr.bf16.mxu0 0
          %363 = vmatpush1.bf16.msra.mxu0 0
          %364 = vmatprep.subr.bf16.mxu0 0
          %365 = vmatpush1.bf16.msra.mxu0 0
          %366 = vmatprep.subr.bf16.mxu0 0
          %367 = vmatpush1.bf16.msra.mxu0 0
          %368 = vmatprep.subr.bf16.mxu0 0
          %369 = vmatpush1.bf16.msra.mxu0 0
          %370 = vmatprep.subr.bf16.mxu0 0
          %371 = vmatpush1.bf16.msra.mxu0 0
          %372 = vmatprep.subr.bf16.mxu0 0
          %373 = vmatpush1.bf16.msra.mxu0 0
          %374 = vmatprep.subr.bf16.mxu0 0
          %375 = vmatpush1.bf16.msra.mxu0 0
          %376 = vmatprep.subr.bf16.mxu0 0
          %377 = vmatpush1.bf16.msra.mxu0 0
          %378 = vmatprep.subr.bf16.mxu0 0
          %379 = vmatpush1.bf16.msra.mxu0 0
          %380 = vmatprep.mubr.bf16.mxu0 0
          %381 = vmatmul.mubr.bf16.gmra.mrb[0].mxu0 %v342
          %v382 = vpop.f32.mrb[0].mxu0
          %v383 = vadd.f32 0.0, %v382
          %v384 = vpop.f32.mrb[0].mxu0
          %v385 = vpop.f32.mrb[0].mxu0
          %v386 = vpop.f32.mrb[0].mxu0
          %387 = vdwg.mxu0
          %v388 = vadd.f32 %v335, %v383
          %389 = vst [vmem:[#allocation3] sm:$0x3f] %v388
        $region52: #{tpu_custom_call.1} parent=31 // pred_fallthru
          _
        // Predicated region
        $region53: #{tpu_custom_call.1} parent=31 // pred_check
          _
        $region54: #{tpu_custom_call.1} parent=31 // pred_check_branch
          %391 = sbr.rel (%p260) target = $region56
        $region55: #{tpu_custom_call.1} parent=31 // pred_region
          %v392 = vld [vmem:[#allocation3] sm:$0x3f]
          %393 = vst [vmem:[%s250] sm:$0x3f] %v392
        $region56: #{tpu_custom_call.1} parent=31 // pred_fallthru
          _
        %s394 = sand.u32 %s130, 1
        %s395 = scalar_lea.sflag [#allocation6], %s394
        %s396 = sand.u32 %s130, 1
        %s397 = smul.addr %s396, 8
        %s398 = scalar_lea.vmem [#allocation9], %s397
        // Predicated region
        $region57: #{tpu_custom_call.1} parent=31 // pred_check
          %p399 = pneg %p140
        $region58: #{tpu_custom_call.1} parent=31 // pred_check_branch
          %401 = sbr.rel (%p399) target = $region60
        $region59: #{tpu_custom_call.1} parent=31 // pred_region
          %s403 = ssub.s32 128, 128
          %404 = vsyncadd %s395, %s403
          %s405 = smul.addr %s26, 128
          %s406 = scalar_lea.hbm %s3, %s405
          %s408 = sshll.u32 %s398, 4
          %s409 = int_to_ptr.vmem [resolvable:$true] %s408
          %411 = dma.vmem_to_hbm [thread:$0]  %s409, 128, %s406, %s395
        $region60: #{tpu_custom_call.1} parent=31 // pred_fallthru
          _
      $region32: #{tpu_custom_call.1} parent=5 // pred_fallthru
        _
      %p412 = scmp.le.s32.totalorder 2, %s16
      // Predicated region
      $region61: #{tpu_custom_call.1} parent=5 // pred_check
        %p413 = pneg %p412
      $region62: #{tpu_custom_call.1} parent=5 // pred_check_branch
        %415 = sbr.rel (%p413) target = $region64
      $region63: #{tpu_custom_call.1} parent=5 // pred_region
        %s416 = ssub.s32 %s16, 2
        // Predicated region
        $region65: #{tpu_custom_call.1} parent=63 // pred_check
          %p417 = pneg %p146
        $region66: #{tpu_custom_call.1} parent=63 // pred_check_branch
          %419 = sbr.rel (%p417) target = $region68
        $region67: #{tpu_custom_call.1} parent=63 // pred_region
          %s420 = sand.u32 %s131, 1
          %s421 = scalar_lea.sflag [#allocation6], %s420
          %s422 = sand.u32 %s131, 1
          %s423 = smul.addr %s422, 8
          %s424 = scalar_lea.vmem [#allocation9], %s423
          %425 = dma.done %s421, 128
        $region68: #{tpu_custom_call.1} parent=63 // pred_fallthru
          _
      $region64: #{tpu_custom_call.1} parent=5 // pred_fallthru
        _
    $region6: #{tpu_custom_call.1} parent=1 // loop_footer
      %s20 = sadd.s32 1, %s16
    $region7: #{tpu_custom_call.1} parent=1 // loop_footer_branch
      %15 = sbr.rel target = $region3
    $region8: #{tpu_custom_call.1} parent=1 // loop_exit
      _
    %426 = vsyncpa [#allocation5], 1
    %s427 = scalar_lea.sflag [#allocation5], 1
    %428 = vsyncpa %s427, 1
    %429 = vsyncpa [#allocation8], 1
    %430 = vsyncpa [#allocation6], 1
    %s431 = scalar_lea.sflag [#allocation6], 1
    %432 = vsyncpa %s431, 1

</llo_original>
